<compile_context>
chip_gen: v6e
topology: v6e:2x2x1
jax: 0.10.0
libtpu: 0.0.40
codegen_flags: <defaults>
</compile_context>

<pallas_src>
import jax
import jax.numpy as jnp
from jax.experimental import pallas as pl
from jax.experimental.pallas import tpu as pltpu

EPS = 1e-5


def _instance_norm_kernel(x_ref, o_ref):
    # x_ref / o_ref: (ROWS, H*W) block; each row is one (n, c) instance.
    x = x_ref[...].astype(jnp.float32)
    hw = x.shape[-1]
    inv_hw = jnp.float32(1.0 / hw)
    s = jnp.sum(x, axis=-1, keepdims=True)
    ss = jnp.sum(x * x, axis=-1, keepdims=True)
    mean = s * inv_hw
    var = ss * inv_hw - mean * mean           # biased variance
    var = jnp.maximum(var, 0.0)               # guard tiny negative cancellation
    inv_std = jax.lax.rsqrt(var + EPS)
    o_ref[...] = ((x - mean) * inv_std).astype(o_ref.dtype)


def instance_norm2d(x, *, target_tile_bytes=4 * 1024 * 1024):
    """InstanceNorm2d (no affine) on an NCHW tensor via a Pallas TPU kernel."""
    N, C, H, W = x.shape
    rows_total = N * C
    hw = H * W

    # Pick rows-per-block so one tile of f32 work is ~target_tile_bytes.
    rows_per_block = max(1, target_tile_bytes // (hw * 4))
    if rows_per_block >= rows_total:
        # Full-extent block along rows: always a legal block shape.
        rows_per_block = rows_total
        padded_rows = rows_total
    else:
        # Sublane-aligned block; pad rows so the grid divides evenly.
        rows_per_block = max(8, (rows_per_block // 8) * 8)
        padded_rows = ((rows_total + rows_per_block - 1)
                       // rows_per_block) * rows_per_block

    x2 = x.reshape(rows_total, hw)
    if padded_rows != rows_total:
        # Zero rows normalize to zero (mean=0, var=0, eps keeps rsqrt finite).
        x2 = jnp.pad(x2, ((0, padded_rows - rows_total), (0, 0)))

    grid = (padded_rows // rows_per_block,)
    out = pl.pallas_call(
        _instance_norm_kernel,
        out_shape=jax.ShapeDtypeStruct((padded_rows, hw), x.dtype),
        grid=grid,
        in_specs=[pl.BlockSpec((rows_per_block, hw), lambda i: (i, 0))],
        out_specs=pl.BlockSpec((rows_per_block, hw), lambda i: (i, 0)),
        compiler_params=pltpu.CompilerParams(
            dimension_semantics=("parallel",)  # shards row-blocks across TCs on v7x
        ),
    )(x2)

    if padded_rows != rows_total:
        out = out[:rows_total]
    return out.reshape(N, C, H, W)


def _reference_instance_norm(x):
    xf = x.astype(jnp.float32)
    mean = jnp.mean(xf, axis=(2, 3), keepdims=True)
    var = jnp.var(xf, axis=(2, 3), keepdims=True)  # biased
    return ((xf - mean) * jax.lax.rsqrt(var + EPS)).astype(x.dtype)


if __name__ == "__main__":
    key = jax.random.PRNGKey(0)
    # nn.InstanceNorm2d(2) expects 2 channels.
    x = jax.random.normal(key, (2, 2, 16, 16), dtype=jnp.float32)

    out = instance_norm2d(x)
    jax.block_until_ready(out)

    ref = _reference_instance_norm(x)
    assert out.shape == x.shape and out.dtype == x.dtype
    assert jnp.allclose(out, ref, atol=1e-5, rtol=1e-5)

    print("KERNEL_OK")
</pallas_src>

<mosaic_0001>
module attributes {stable_mosaic.version = 11 : i64} {
  func.func @_instance_norm_kernel(%arg0: i32, %arg1: memref<4x256xf32, #tpu.memory_space<vmem>>, %arg2: memref<4x256xf32, #tpu.memory_space<vmem>>) attributes {dimension_semantics = [#tpu.dimension_semantics<parallel>], iteration_bounds = array<i64: 1>, scalar_prefetch = 0 : i64, scratch_operands = 0 : i64, tpu.core_type = #tpu.core_type<tc>, window_params = [{transform_indices = @transform_0, window_bounds = array<i64: 4, 256>}, {transform_indices = @transform_1, window_bounds = array<i64: 4, 256>}]} {
    %c0 = arith.constant 0 : index
    %c0_0 = arith.constant 0 : index
    %0 = vector.load %arg1[%c0, %c0_0] : memref<4x256xf32, #tpu.memory_space<vmem>>, vector<4x256xf32>
    %cst = arith.constant dense<0.000000e+00> : vector<4xf32>
    %1 = vector.multi_reduction <add>, %0, %cst [1] : vector<4x256xf32> to vector<4xf32>
    %2 = vector.shape_cast %1 : vector<4xf32> to vector<4x1xf32>
    %3 = arith.mulf %0, %0 : vector<4x256xf32>
    %cst_1 = arith.constant dense<0.000000e+00> : vector<4xf32>
    %4 = vector.multi_reduction <add>, %3, %cst_1 [1] : vector<4x256xf32> to vector<4xf32>
    %5 = vector.shape_cast %4 : vector<4xf32> to vector<4x1xf32>
    %cst_2 = arith.constant 3.906250e-03 : f32
    %6 = vector.broadcast %cst_2 : f32 to vector<4x1xf32>
    %7 = arith.mulf %2, %6 : vector<4x1xf32>
    %cst_3 = arith.constant 3.906250e-03 : f32
    %8 = vector.broadcast %cst_3 : f32 to vector<4x1xf32>
    %9 = arith.mulf %5, %8 : vector<4x1xf32>
    %10 = arith.mulf %7, %7 : vector<4x1xf32>
    %11 = arith.subf %9, %10 : vector<4x1xf32>
    %cst_4 = arith.constant 0.000000e+00 : f32
    %12 = vector.broadcast %cst_4 : f32 to vector<4x1xf32>
    %13 = arith.maximumf %11, %12 : vector<4x1xf32>
    %cst_5 = arith.constant 9.99999974E-6 : f32
    %14 = vector.broadcast %cst_5 : f32 to vector<4x1xf32>
    %15 = arith.addf %13, %14 : vector<4x1xf32>
    %16 = math.rsqrt %15 : vector<4x1xf32>
    %17 = vector.broadcast %7 : vector<4x1xf32> to vector<4x256xf32>
    %18 = arith.subf %0, %17 : vector<4x256xf32>
    %19 = vector.broadcast %16 : vector<4x1xf32> to vector<4x256xf32>
    %20 = arith.mulf %18, %19 : vector<4x256xf32>
    %c0_6 = arith.constant 0 : index
    %c0_7 = arith.constant 0 : index
    %21 = vector.load %arg2[%c0_6, %c0_7] : memref<4x256xf32, #tpu.memory_space<vmem>>, vector<4x256xf32>
    tpu.vector_store %arg2[%c0_6, %c0_7], %20 {strides = array<i32>} : memref<4x256xf32, #tpu.memory_space<vmem>>, vector<4x256xf32>,
    return
  }
  func.func @transform_0(%arg0: i32) -> (i32, i32) {
    %c0_i32 = arith.constant 0 : i32
    %c0_i32_0 = arith.constant 0 : i32
    return %arg0, %c0_i32 : i32, i32
  }
  func.func @transform_1(%arg0: i32) -> (i32, i32) {
    %c0_i32 = arith.constant 0 : i32
    %c0_i32_0 = arith.constant 0 : i32
    return %arg0, %c0_i32 : i32, i32
  }
}

</mosaic_0001>

<llo_original>
// kernel: tpu_custom_call.1
$region0: #{tpu_custom_call.1}
  #allocation0 [shape = 'u32[]', space=smem, size = 0x4, offset = 0x4, fixed_abs, tag = 'smem constant byte address 0x4 - core index']
  #allocation1 [shape = 'u32[144,128]{1,0:T(1,128)}', space=vmem, size = 0x12000, scoped, tag = 'internal scratch']
  %s0 = inlined_call_operand.hbm [shape: f32[4,256], index: 0, kind: input, shape index: {}]
  %s1 = inlined_call_operand.hbm [shape: f32[4,256], index: 1, kind: output, shape index: {}]
  %s2 = sld [smem:[#allocation0]]
  $region18: #{tpu_custom_call.1} parent=0
    _
  %s4 = ssub.s32 1, %s2
  %s5 = scalar_select 0, %s4, %s2
  $region1: #{tpu_custom_call.1} parent=0
    #allocation2 [shape = 'u8[4096]{0}', space=vmem, size = 0x1000, scoped, tag = 'input window, operand 0, single buffered']
    #allocation3 [shape = 's32[1]{0}', space=sflag, size = 0x4, scoped, tag = 'scoped memory for tpu_custom_call.1']
    #allocation4 [shape = 's32[1]{0}', space=sflag, size = 0x4, scoped, tag = 'scoped memory for tpu_custom_call.1']
    #allocation5 [shape = 'u8[4096]{0}', space=vmem, size = 0x1000, scoped, tag = 'output window, operand 0, single buffered']
    %6 = vsyncpa [#allocation3], 0
    %7 = vsyncpa [#allocation4], 0
    // Predicated region
    $region2: #{tpu_custom_call.1} parent=1 // pred_check
      _
    $region3: #{tpu_custom_call.1} parent=1 // pred_check_branch
      %9 = sbr.rel (0) target = $region5
    $region4: #{tpu_custom_call.1} parent=1 // pred_region
      %s11 = ssub.s32 128, 128
      %12 = vsyncadd [#allocation3], %s11
      %s14 = sshll.u32 [#allocation2], 4
      %s15 = int_to_ptr.vmem [resolvable:$true] %s14
      %17 = dma.hbm_to_vmem [thread:$0]  %s0, 128, %s15, [#allocation3]
    $region5: #{tpu_custom_call.1} parent=1 // pred_fallthru
      _
    // Predicated region
    $region6: #{tpu_custom_call.1} parent=1 // pred_check
      _
    $region7: #{tpu_custom_call.1} parent=1 // pred_check_branch
      %19 = sbr.rel (0) target = $region9
    $region8: #{tpu_custom_call.1} parent=1 // pred_region
      %20 = dma.done [#allocation3], 128
    $region9: #{tpu_custom_call.1} parent=1 // pred_fallthru
      _
    %v21 = vld [vmem:[#allocation2] sm:$0xff]
    %v23 = vcombine.high %v21, %v21
    %vm25 = vcmask 1043456
    %v26 = vsel %vm25, %v21, 0.0
    %v27 = vsel %vm25, %v23, 0.0
    %v28 = vadd.f32 %v26, %v27
    %29 = vadd.xlane.f32.xlu0 %v28
    %v30 = vpop.xlane.xlu0 %29
    %v31 = vmul.f32 %v21, %v21
    %v33 = vcombine.high %v31, %v31
    %v35 = vsel %vm25, %v31, 0.0
    %v36 = vsel %vm25, %v33, 0.0
    %v37 = vadd.f32 %v35, %v36
    %38 = vadd.xlane.f32.xlu0 %v37
    %v39 = vpop.xlane.xlu0 %38
    %v40 = vmul.f32 %v30, 0.00390625
    %v41 = vmul.f32 %v39, 0.00390625
    %v42 = vmul.f32 %v40, %v40
    %v43 = vsub.f32 %v41, %v42
    %v44 = vmax.f32 %v43, 0.0
    %v45 = vadd.f32 %v44, 1e-05
    %v46 = vrsqrt.pop %v45
    %v49 = vunpack.c.l.s4 839922192
    %v50 = vunpack.c.0.s8 %v49
    %v51 = vlaneseq
    %v52 = vshrl.u32 %v51, 7
    %v53 = vsub.s32 %v50, %v52
    %v54 = vrot.slane %v40, %v53
    %v56 = vsub.f32 %v21, %v54
    %v59 = vunpack.c.l.s4 839922192
    %v60 = vunpack.c.0.s8 %v59
    %v61 = vlaneseq
    %v62 = vshrl.u32 %v61, 7
    %v63 = vsub.s32 %v60, %v62
    %v64 = vrot.slane %v46, %v63
    %v66 = vmul.f32 %v56, %v64
    %67 = vst [vmem:[#allocation5] sm:$0xff] %v66
    // Predicated region
    $region10: #{tpu_custom_call.1} parent=1 // pred_check
      _
    $region11: #{tpu_custom_call.1} parent=1 // pred_check_branch
      %69 = sbr.rel (0) target = $region13
    $region12: #{tpu_custom_call.1} parent=1 // pred_region
      %s71 = ssub.s32 128, 128
      %72 = vsyncadd [#allocation4], %s71
      %s74 = sshll.u32 [#allocation5], 4
      %s75 = int_to_ptr.vmem [resolvable:$true] %s74
      %77 = dma.vmem_to_hbm [thread:$0]  %s75, 128, %s1, [#allocation4]
    $region13: #{tpu_custom_call.1} parent=1 // pred_fallthru
      _
    // Predicated region
    $region14: #{tpu_custom_call.1} parent=1 // pred_check
      _
    $region15: #{tpu_custom_call.1} parent=1 // pred_check_branch
      %79 = sbr.rel (0) target = $region17
    $region16: #{tpu_custom_call.1} parent=1 // pred_region
      %80 = dma.done [#allocation4], 128
    $region17: #{tpu_custom_call.1} parent=1 // pred_fallthru
      _
    %81 = vsyncpa [#allocation3], 1
    %82 = vsyncpa [#allocation4], 1

</llo_original>
